<compile_context>
chip_gen: v7x
topology: tpu7x:2x2x1
jax: 0.10.0
libtpu: 0.0.40
codegen_flags: <defaults>
</compile_context>

<pallas_src>
import functools

import jax
import jax.numpy as jnp
from jax.experimental import pallas as pl
from jax.experimental.pallas import tpu as pltpu


# ----------------------------------------------------------------------------
# Fused single-pass: mean_t -> MLP -> sigmoid -> scale, one HBM read of x.
# ----------------------------------------------------------------------------
def _se_fused_kernel(x_ref, w1_ref, w2_ref, o_ref, *, total_t):
    x = x_ref[...]                                           # [b_tile, C, T]
    y = jnp.sum(x, axis=-1, dtype=jnp.float32) * (1.0 / total_t)   # [b_tile, C]
    h = jnp.dot(y.astype(w1_ref.dtype), w1_ref[...],
                preferred_element_type=jnp.float32)          # [b_tile, H]
    h = jnp.maximum(h, 0.0)                                  # ReLU
    s = jnp.dot(h.astype(w2_ref.dtype), w2_ref[...],
                preferred_element_type=jnp.float32)          # [b_tile, C]
    s = jax.nn.sigmoid(s)
    # Multiply in x's dtype (native bf16 VALU on v6e/v7x; no f32 promotion).
    o_ref[...] = (x * s.astype(x.dtype)[:, :, None]).astype(o_ref.dtype)


# ----------------------------------------------------------------------------
# Phase A: squeeze (temporal mean) + excitation MLP -> gate [B, C, 1]
# ----------------------------------------------------------------------------
def _se_gate_kernel(x_ref, w1_ref, w2_ref, gate_ref, acc_ref,
                    *, total_t, t_tile, num_t):
    t = pl.program_id(1)

    @pl.when(t == 0)
    def _init():
        acc_ref[...] = jnp.zeros_like(acc_ref)

    x = x_ref[...]                                           # [b_tile, C, t_tile]
    rem = total_t - (num_t - 1) * t_tile                     # valid lanes, last tile
    if rem == t_tile:
        # T divides evenly: plain f32 accumulation on every tile.
        acc_ref[...] += jnp.sum(x, axis=-1, dtype=jnp.float32)
    else:
        # Ragged T: only the LAST tile pays for the mask (static lane bound).
        @pl.when(t < num_t - 1)
        def _full_tile():
            acc_ref[...] += jnp.sum(x, axis=-1, dtype=jnp.float32)

        @pl.when(t == num_t - 1)
        def _ragged_tile():
            lane = jax.lax.broadcasted_iota(jnp.int32, x.shape, 2)
            acc_ref[...] += jnp.sum(jnp.where(lane < rem, x, 0),
                                    axis=-1, dtype=jnp.float32)

    @pl.when(t == num_t - 1)
    def _finalize():
        y = acc_ref[...] * (1.0 / total_t)                   # [b_tile, C] f32 mean
        h = jnp.dot(y.astype(w1_ref.dtype), w1_ref[...],
                    preferred_element_type=jnp.float32)      # [b_tile, H]
        h = jnp.maximum(h, 0.0)
        s = jnp.dot(h.astype(w2_ref.dtype), w2_ref[...],
                    preferred_element_type=jnp.float32)      # [b_tile, C]
        s = jax.nn.sigmoid(s)
        gate_ref[...] = s.astype(gate_ref.dtype)[:, :, None]


# ----------------------------------------------------------------------------
# Phase B: broadcast-scale x by the gate (pure mem-bound elementwise pass)
# ----------------------------------------------------------------------------
def _se_scale_kernel(x_ref, gate_ref, o_ref):
    # gate is already x.dtype, so the multiply stays in the native dtype.
    o_ref[...] = (x_ref[...] * gate_ref[...]).astype(o_ref.dtype)


# ----------------------------------------------------------------------------
# Tiling / budget helpers
# ----------------------------------------------------------------------------
def _vmem_budget():
    """Generation-aware (per-block budget, scoped vmem limit) in bytes."""
    vmem_phys = None
    try:
        info = pltpu.get_tpu_info()
        vmem_phys = getattr(info, "vmem_capacity_bytes", None)
    except Exception:
        vmem_phys = None
    if vmem_phys is not None and vmem_phys >= 100 * 1024 * 1024:
        # v5e / v6e: 128 MiB physical VMEM.
        return 12 * 1024 * 1024, 96 * 1024 * 1024
    # v7x-class (64 MiB physical) or unknown: stay conservative but still far
    # above the scoped default, keeping deep double-buffering alive.
    return 8 * 1024 * 1024, 48 * 1024 * 1024


def _choose_tiles(B, C, T, itemsize, block_budget, max_b_tile):
    """Pick (b_tile, t_tile) with b_tile*C*t_tile*itemsize <= block_budget.

    Prefer a long, lane-dense t_tile (contiguous HBM bursts, unmasked vst);
    only grow the batch tile once the whole time axis already fits.
    """
    max_b_tile = max(1, min(max_b_tile, B))
    per_lane = C * itemsize
    b_tile = 1
    if T * per_lane <= block_budget:
        t_tile = T                                     # whole time axis per block
    else:
        max_lanes = max(128, (block_budget // per_lane) // 128 * 128)
        t_tile = min(T, max_lanes)                     # multiple of 128 (< T here)
    while (b_tile * 2 <= max_b_tile
           and b_tile * 2 * t_tile * per_lane <= block_budget):
        b_tile *= 2
    return b_tile, t_tile


# ----------------------------------------------------------------------------
# Public wrapper
# ----------------------------------------------------------------------------
def squeeze_excite(x, w1_t, w2_t, *, block_budget_override=None):
    """x: [B, C, T]; w1_t: [C, C//r]; w2_t: [C//r, C] -> [B, C, T]."""
    B, C, T = x.shape
    H = w1_t.shape[1]
    itemsize = jnp.dtype(x.dtype).itemsize
    w_itemsize = jnp.dtype(w1_t.dtype).itemsize
    gate_dtype = x.dtype

    block_budget, vmem_limit = _vmem_budget()
    if block_budget_override is not None:
        block_budget = int(block_budget_override)

    def cparams(semantics):
        return pltpu.CompilerParams(dimension_semantics=semantics,
                                    vmem_limit_bytes=int(vmem_limit))

    # Keep >= 2 batch blocks when possible so the reduction pass (whose only
    # "parallel" axis is batch) is megacore-sharded on v7x.
    max_b_parallel = max(1, B // 2) if B >= 2 else 1

    # ---- Fused single-pass path: a batch-row block covers all of T ---------
    if C * T * itemsize <= block_budget:
        b_tile, _ = _choose_tiles(B, C, T, itemsize, block_budget, max_b_parallel)
        nb = pl.cdiv(B, b_tile)
        return pl.pallas_call(
            functools.partial(_se_fused_kernel, total_t=T),
            out_shape=jax.ShapeDtypeStruct((B, C, T), x.dtype),
            grid_spec=pltpu.PrefetchScalarGridSpec(
                num_scalar_prefetch=0,
                grid=(nb,),
                in_specs=[
                    pl.BlockSpec((b_tile, C, T), lambda b: (b, 0, 0)),
                    pl.BlockSpec((C, H), lambda b: (0, 0)),
                    pl.BlockSpec((H, C), lambda b: (0, 0)),
                ],
                out_specs=pl.BlockSpec((b_tile, C, T), lambda b: (b, 0, 0)),
            ),
            compiler_params=cparams(("parallel",)),
            cost_estimate=pl.CostEstimate(
                flops=int(2 * B * C * T + 4 * B * C * H),
                transcendentals=int(B * C),
                bytes_accessed=int(2 * B * C * T * itemsize
                                   + 2 * C * H * w_itemsize),
            ),
        )(x, w1_t, w2_t)

    # ---- Phase A: gate = sigmoid(MLP(mean_t(x))) -> [B, C, 1] --------------
    # Input-only big block (no large output), so give it 2x the Phase B budget.
    b_tile_a, t_tile_a = _choose_tiles(B, C, T, itemsize,
                                       2 * block_budget, max_b_parallel)
    nb_a = pl.cdiv(B, b_tile_a)
    nt_a = pl.cdiv(T, t_tile_a)
    gate = pl.pallas_call(
        functools.partial(_se_gate_kernel, total_t=T, t_tile=t_tile_a,
                          num_t=nt_a),
        out_shape=jax.ShapeDtypeStruct((B, C, 1), gate_dtype),
        grid_spec=pltpu.PrefetchScalarGridSpec(
            num_scalar_prefetch=0,
            grid=(nb_a, nt_a),
            in_specs=[
                pl.BlockSpec((b_tile_a, C, t_tile_a), lambda b, t: (b, 0, t)),
                pl.BlockSpec((C, H), lambda b, t: (0, 0)),
                pl.BlockSpec((H, C), lambda b, t: (0, 0)),
            ],
            out_specs=pl.BlockSpec((b_tile_a, C, 1), lambda b, t: (b, 0, 0)),
            scratch_shapes=[pltpu.VMEM((b_tile_a, C), jnp.float32)],
        ),
        compiler_params=cparams(("parallel", "arbitrary")),
        cost_estimate=pl.CostEstimate(
            flops=int(B * C * T + 4 * B * C * H),
            transcendentals=int(B * C),
            bytes_accessed=int(B * C * T * itemsize
                               + 2 * C * H * w_itemsize
                               + B * C * itemsize),
        ),
    )(x, w1_t, w2_t)

    # ---- Phase B: out = x * gate  (lane-dense tiled scale pass) ------------
    b_tile_b, t_tile_b = _choose_tiles(B, C, T, itemsize, block_budget, B)
    nb_b = pl.cdiv(B, b_tile_b)
    nt_b = pl.cdiv(T, t_tile_b)
    out = pl.pallas_call(
        _se_scale_kernel,
        out_shape=jax.ShapeDtypeStruct((B, C, T), x.dtype),
        grid_spec=pltpu.PrefetchScalarGridSpec(
            num_scalar_prefetch=0,
            grid=(nb_b, nt_b),
            in_specs=[
                pl.BlockSpec((b_tile_b, C, t_tile_b), lambda b, t: (b, 0, t)),
                pl.BlockSpec((b_tile_b, C, 1), lambda b, t: (b, 0, 0)),
            ],
            out_specs=pl.BlockSpec((b_tile_b, C, t_tile_b),
                                   lambda b, t: (b, 0, t)),
        ),
        compiler_params=cparams(("parallel", "parallel")),
        cost_estimate=pl.CostEstimate(
            flops=int(B * C * T),
            transcendentals=0,
            bytes_accessed=int(2 * B * C * T * itemsize + B * C * itemsize),
        ),
    )(x, gate)
    return out


def reference_squeeze_excite(x, w1_t, w2_t):
    y = jnp.mean(x, axis=-1)                    # [B, C]
    h = jnp.maximum(y @ w1_t, 0.0)              # [B, C//r]
    s = jax.nn.sigmoid(h @ w2_t)                # [B, C]
    return x * s[:, :, None]


if __name__ == "__main__":
    # --- Test 1: small shapes, exercises the fused single-pass path ---------
    B, C, T = 2, 8, 16
    reduction_ratio = 2
    H = C // reduction_ratio

    key = jax.random.PRNGKey(0)
    kx, k1, k2 = jax.random.split(key, 3)

    x = jax.random.normal(kx, (B, C, T), dtype=jnp.float32)
    # PyTorch Linear weight is [out, in]; store pre-transposed for the kernel.
    w1 = jax.random.normal(k1, (H, C), dtype=jnp.float32) * 0.1   # fc[0].weight
    w2 = jax.random.normal(k2, (C, H), dtype=jnp.float32) * 0.1   # fc[2].weight

    out = jax.block_until_ready(squeeze_excite(x, w1.T, w2.T))
    ref = reference_squeeze_excite(x, w1.T, w2.T)
    assert out.shape == (B, C, T)
    assert jnp.allclose(out, ref, atol=1e-5, rtol=1e-5), "fused path mismatch"

    # --- Test 2: force the two-phase path (tiny block budget) with ragged T -
    B2, C2, T2 = 3, 8, 200
    H2 = C2 // reduction_ratio
    kx2, k3, k4 = jax.random.split(jax.random.PRNGKey(1), 3)
    x2 = jax.random.normal(kx2, (B2, C2, T2), dtype=jnp.float32)
    w3 = jax.random.normal(k3, (H2, C2), dtype=jnp.float32) * 0.1
    w4 = jax.random.normal(k4, (C2, H2), dtype=jnp.float32) * 0.1

    out2 = jax.block_until_ready(
        squeeze_excite(x2, w3.T, w4.T, block_budget_override=2560))
    ref2 = reference_squeeze_excite(x2, w3.T, w4.T)
    assert out2.shape == (B2, C2, T2)
    assert jnp.allclose(out2, ref2, atol=1e-5, rtol=1e-5), "two-phase mismatch"

    print("KERNEL_OK")
</pallas_src>

<mosaic_0001>
module attributes {stable_mosaic.version = 11 : i64} {
  func.func @_se_fused_kernel(%arg0: i32, %arg1: memref<1x8x16xf32, #tpu.memory_space<vmem>>, %arg2: memref<8x4xf32, #tpu.memory_space<vmem>>, %arg3: memref<4x8xf32, #tpu.memory_space<vmem>>, %arg4: memref<1x8x16xf32, #tpu.memory_space<vmem>>) attributes {dimension_semantics = [#tpu.dimension_semantics<parallel>], iteration_bounds = array<i64: 2>, scalar_prefetch = 0 : i64, scratch_operands = 0 : i64, tpu.core_type = #tpu.core_type<tc>, window_params = [{transform_indices = @transform_0, window_bounds = array<i64: 1, 8, 16>}, {pipeline_mode = #tpu.pipeline_mode<synchronous>, transform_indices = @transform_1, window_bounds = array<i64: 8, 4>}, {pipeline_mode = #tpu.pipeline_mode<synchronous>, transform_indices = @transform_2, window_bounds = array<i64: 4, 8>}, {transform_indices = @transform_3, window_bounds = array<i64: 1, 8, 16>}]} {
    %c0 = arith.constant 0 : index
    %c0_0 = arith.constant 0 : index
    %c0_1 = arith.constant 0 : index
    %0 = vector.load %arg1[%c0, %c0_0, %c0_1] : memref<1x8x16xf32, #tpu.memory_space<vmem>>, vector<1x8x16xf32>
    %cst = arith.constant dense<0.000000e+00> : vector<1x8xf32>
    %1 = vector.multi_reduction <add>, %0, %cst [2] : vector<1x8x16xf32> to vector<1x8xf32>
    %cst_2 = arith.constant 6.250000e-02 : f32
    %2 = vector.broadcast %cst_2 : f32 to vector<1x8xf32>
    %3 = arith.mulf %1, %2 : vector<1x8xf32>
    %c0_3 = arith.constant 0 : index
    %c0_4 = arith.constant 0 : index
    %4 = vector.load %arg2[%c0_3, %c0_4] : memref<8x4xf32, #tpu.memory_space<vmem>>, vector<8x4xf32>
    %cst_5 = arith.constant dense<0.000000e+00> : vector<1x4xf32>
    %5 = tpu.matmul %3, %4, %cst_5 {dimension_numbers = #tpu.dot_dimension_numbers<[1], [0], [0], [1], [0, 0, 1, 1], [], []>} : vector<1x8xf32>, vector<8x4xf32>, vector<1x4xf32> -> vector<1x4xf32>
    %cst_6 = arith.constant 0.000000e+00 : f32
    %6 = vector.broadcast %cst_6 : f32 to vector<1x4xf32>
    %7 = arith.maximumf %5, %6 : vector<1x4xf32>
    %c0_7 = arith.constant 0 : index
    %c0_8 = arith.constant 0 : index
    %8 = vector.load %arg3[%c0_7, %c0_8] : memref<4x8xf32, #tpu.memory_space<vmem>>, vector<4x8xf32>
    %cst_9 = arith.constant dense<0.000000e+00> : vector<1x8xf32>
    %9 = tpu.matmul %7, %8, %cst_9 {dimension_numbers = #tpu.dot_dimension_numbers<[1], [0], [0], [1], [0, 0, 1, 1], [], []>} : vector<1x4xf32>, vector<4x8xf32>, vector<1x8xf32> -> vector<1x8xf32>
    %10 = arith.negf %9 : vector<1x8xf32>
    %11 = math.exp %10 : vector<1x8xf32>
    %cst_10 = arith.constant 1.000000e+00 : f32
    %12 = vector.broadcast %cst_10 : f32 to vector<1x8xf32>
    %13 = arith.addf %12, %11 : vector<1x8xf32>
    %14 = arith.divf %12, %13 : vector<1x8xf32>
    %15 = vector.shape_cast %14 : vector<1x8xf32> to vector<1x8x1xf32>
    %16 = vector.broadcast %15 : vector<1x8x1xf32> to vector<1x8x16xf32>
    %17 = arith.mulf %0, %16 : vector<1x8x16xf32>
    %c0_11 = arith.constant 0 : index
    %c0_12 = arith.constant 0 : index
    %c0_13 = arith.constant 0 : index
    %18 = vector.load %arg4[%c0_11, %c0_12, %c0_13] : memref<1x8x16xf32, #tpu.memory_space<vmem>>, vector<1x8x16xf32>
    tpu.vector_store %arg4[%c0_11, %c0_12, %c0_13], %17 {strides = array<i32>} : memref<1x8x16xf32, #tpu.memory_space<vmem>>, vector<1x8x16xf32>,
    return
  }
  func.func @transform_0(%arg0: i32) -> (i32, i32, i32) {
    %c0_i32 = arith.constant 0 : i32
    %c0_i32_0 = arith.constant 0 : i32
    %c0_i32_1 = arith.constant 0 : i32
    return %arg0, %c0_i32, %c0_i32_0 : i32, i32, i32
  }
  func.func @transform_1(%arg0: i32) -> (i32, i32) {
    %c0_i32 = arith.constant 0 : i32
    %c0_i32_0 = arith.constant 0 : i32
    %c0_i32_1 = arith.constant 0 : i32
    return %c0_i32, %c0_i32_0 : i32, i32
  }
  func.func @transform_2(%arg0: i32) -> (i32, i32) {
    %c0_i32 = arith.constant 0 : i32
    %c0_i32_0 = arith.constant 0 : i32
    %c0_i32_1 = arith.constant 0 : i32
    return %c0_i32, %c0_i32_0 : i32, i32
  }
  func.func @transform_3(%arg0: i32) -> (i32, i32, i32) {
    %c0_i32 = arith.constant 0 : i32
    %c0_i32_0 = arith.constant 0 : i32
    %c0_i32_1 = arith.constant 0 : i32
    return %arg0, %c0_i32, %c0_i32_0 : i32, i32, i32
  }
}

</mosaic_0001>

<llo_original>
// kernel: tpu_custom_call.1
$region0: #{tpu_custom_call.1}
  #allocation0 [shape = 'u32[]', space=smem, size = 0x4, offset = 0x4, fixed_abs, tag = 'smem constant byte address 0x4 - core index']
  #allocation1 [shape = 'u32[144,128]{1,0:T(1,128)}', space=vmem, size = 0x12000, scoped, tag = 'internal scratch']
  %s0 = inlined_call_operand.hbm [shape: f32[2,8,16], index: 0, kind: input, shape index: {}]
  %s1 = inlined_call_operand.vmem [shape: f32[8,4], index: 1, kind: input, shape index: {}]
  %s2 = inlined_call_operand.vmem [shape: f32[4,8], index: 2, kind: input, shape index: {}]
  %s3 = inlined_call_operand.hbm [shape: f32[2,8,16], index: 3, kind: output, shape index: {}]
  %s4 = sld [smem:[#allocation0]]
  $region49: #{tpu_custom_call.1} parent=0
    _
  %s6 = ssub.s32 1, %s4
  %s7 = scalar_select 0, %s6, %s4
  $region1: #{tpu_custom_call.1} parent=0
    #allocation2 [shape = 'u8[8192]{0}', space=vmem, size = 0x2000, scoped, tag = 'input window, operand 0']
    #allocation3 [shape = 's32[2]{0}', space=sflag, size = 0x8, scoped, tag = 'scoped memory for tpu_custom_call.1']
    #allocation4 [shape = 's32[2]{0}', space=sflag, size = 0x8, scoped, tag = 'scoped memory for tpu_custom_call.1']
    #allocation5 [shape = 'u8[8192]{0}', space=vmem, size = 0x2000, scoped, tag = 'output window, operand 0']
    %8 = vsyncpa [#allocation3], 0
    %s9 = scalar_lea.sflag [#allocation3], 1
    %10 = vsyncpa %s9, 0
    %11 = vsyncpa [#allocation4], 0
    %s12 = scalar_lea.sflag [#allocation4], 1
    %13 = vsyncpa %s12, 0
    loop: start=0, step=1, limit=4
    $region2: #{tpu_custom_call.1} parent=1 // loop_pre_header
      _
    $region3: #{tpu_custom_call.1} parent=1 // loop_header
      %s15 = sphi 0, %s19
      %p16 = scmp.ge.s32.totalorder %s15, 4
      %s25 = sphi 0, %s27
      %s28 = sphi 0, %s25
      %s29 = sphi 0, %s28
      %s45 = sphi 0, %s29
      %s49 = sphi 0, %s49
      %s51 = sphi 0, %s49
      %s52 = sphi 0, %s51
      %s66 = sphi 0, %s52
      %s70 = sphi 0, %s70
      %s72 = sphi 0, %s70
      %s73 = sphi 0, %s72
      %s87 = sphi 0, %s73
      %s93 = sphi 0, %s95
      %s96 = sphi 0, %s93
      %s97 = sphi 0, %s96
      %s113 = sphi 0, %s97
    $region4: #{tpu_custom_call.1} parent=1 // loop_header_branch
      %18 = sbr.rel (%p16) target = $region8
    $region5: #{tpu_custom_call.1} parent=1 // loop_body
      %s20 = ssub.s32 %s15, 1
      %s21 = ssub.s32 %s15, 2
      %s22 = sadd.s32 %s15, 1
      %s23 = ssub.s32 %s15, %s22
      %p24 = scmp.eq.s32.totalorder %s23, 0
      %s26 = sadd.s32 %s25, 1
      %s27 = scalar_select %p24, %s25, %s26
      %p30 = pneg %p24
      %p31 = scmp.eq.s32.totalorder %s15, 1
      %p32 = por %p30, %p31
      %p33 = scmp.ne.s32.totalorder %s25, %s28
      %p34 = scmp.eq.s32.totalorder %s15, 0
      %p35 = por %p33, %p34
      %p36 = scmp.ne.s32.totalorder %s25, %s28
      %p37 = scmp.eq.s32.totalorder %s20, 1
      %p38 = por %p36, %p37
      %p39 = scmp.ne.s32.totalorder %s28, %s29
      %p40 = scmp.eq.s32.totalorder %s20, 0
      %p41 = por %p39, %p40
      %p42 = scmp.ne.s32.totalorder %s28, %s29
      %p43 = scmp.eq.s32.totalorder %s21, 1
      %p44 = por %p42, %p43
      %p46 = scmp.ne.s32.totalorder %s29, %s45
      %p47 = scmp.eq.s32.totalorder %s21, 0
      %p48 = por %p46, %p47
      %s50 = sadd.s32 %s49, 1
      %p53 = scmp.eq.s32.totalorder %s15, 1
      %p54 = scmp.ne.s32.totalorder %s49, %s51
      %p55 = scmp.eq.s32.totalorder %s15, 0
      %p56 = por %p54, %p55
      %p57 = scmp.ne.s32.totalorder %s49, %s51
      %p58 = scmp.eq.s32.totalorder %s20, 1
      %p59 = por %p57, %p58
      %p60 = scmp.ne.s32.totalorder %s51, %s52
      %p61 = scmp.eq.s32.totalorder %s20, 0
      %p62 = por %p60, %p61
      %p63 = scmp.ne.s32.totalorder %s51, %s52
      %p64 = scmp.eq.s32.totalorder %s21, 1
      %p65 = por %p63, %p64
      %p67 = scmp.ne.s32.totalorder %s52, %s66
      %p68 = scmp.eq.s32.totalorder %s21, 0
      %p69 = por %p67, %p68
      %s71 = sadd.s32 %s70, 1
      %p74 = scmp.eq.s32.totalorder %s15, 1
      %p75 = scmp.ne.s32.totalorder %s70, %s72
      %p76 = scmp.eq.s32.totalorder %s15, 0
      %p77 = por %p75, %p76
      %p78 = scmp.ne.s32.totalorder %s70, %s72
      %p79 = scmp.eq.s32.totalorder %s20, 1
      %p80 = por %p78, %p79
      %p81 = scmp.ne.s32.totalorder %s72, %s73
      %p82 = scmp.eq.s32.totalorder %s20, 0
      %p83 = por %p81, %p82
      %p84 = scmp.ne.s32.totalorder %s72, %s73
      %p85 = scmp.eq.s32.totalorder %s21, 1
      %p86 = por %p84, %p85
      %p88 = scmp.ne.s32.totalorder %s73, %s87
      %p89 = scmp.eq.s32.totalorder %s21, 0
      %p90 = por %p88, %p89
      %s91 = ssub.s32 %s15, %s22
      %p92 = scmp.eq.s32.totalorder %s91, 0
      %s94 = sadd.s32 %s93, 1
      %s95 = scalar_select %p92, %s93, %s94
      %p98 = pneg %p92
      %p99 = scmp.eq.s32.totalorder %s15, 1
      %p100 = por %p98, %p99
      %p101 = scmp.ne.s32.totalorder %s93, %s96
      %p102 = scmp.eq.s32.totalorder %s15, 0
      %p103 = por %p101, %p102
      %p104 = scmp.ne.s32.totalorder %s93, %s96
      %p105 = scmp.eq.s32.totalorder %s20, 1
      %p106 = por %p104, %p105
      %p107 = scmp.ne.s32.totalorder %s96, %s97
      %p108 = scmp.eq.s32.totalorder %s20, 0
      %p109 = por %p107, %p108
      %p110 = scmp.ne.s32.totalorder %s96, %s97
      %p111 = scmp.eq.s32.totalorder %s21, 1
      %p112 = por %p110, %p111
      %p114 = scmp.ne.s32.totalorder %s97, %s113
      %p115 = scmp.eq.s32.totalorder %s21, 0
      %p116 = por %p114, %p115
      %p117 = scmp.le.s32.totalorder 1, %s15
      %p118 = scmp.lt.s32.totalorder %s15, 3
      %p119 = pnand %p117, %p118
      %p120 = pneg %p119
      // Predicated region
      $region9: #{tpu_custom_call.1} parent=5 // pred_check
        _
      $region10: #{tpu_custom_call.1} parent=5 // pred_check_branch
        %122 = sbr.rel (%p119) target = $region12
      $region11: #{tpu_custom_call.1} parent=5 // pred_region
        %s123 = ssub.s32 %s15, 1
        // Predicated region
        $region13: #{tpu_custom_call.1} parent=11 // pred_check
          %p124 = pneg %p62
        $region14: #{tpu_custom_call.1} parent=11 // pred_check_branch
          %126 = sbr.rel (%p124) target = $region16
        $region15: #{tpu_custom_call.1} parent=11 // pred_region
          _
        $region16: #{tpu_custom_call.1} parent=11 // pred_fallthru
          _
        // Predicated region
        $region17: #{tpu_custom_call.1} parent=11 // pred_check
          %p127 = pneg %p83
        $region18: #{tpu_custom_call.1} parent=11 // pred_check_branch
          %129 = sbr.rel (%p127) target = $region20
        $region19: #{tpu_custom_call.1} parent=11 // pred_region
          _
        $region20: #{tpu_custom_call.1} parent=11 // pred_fallthru
          _
      $region12: #{tpu_custom_call.1} parent=5 // pred_fallthru
        _
      %p130 = scmp.lt.s32.totalorder %s15, 2
      // Predicated region
      $region21: #{tpu_custom_call.1} parent=5 // pred_check
        %p131 = pneg %p130
      $region22: #{tpu_custom_call.1} parent=5 // pred_check_branch
        %133 = sbr.rel (%p131) target = $region24
      $region23: #{tpu_custom_call.1} parent=5 // pred_region
        // Predicated region
        $region25: #{tpu_custom_call.1} parent=23 // pred_check
          %p134 = pneg %p35
        $region26: #{tpu_custom_call.1} parent=23 // pred_check_branch
          %136 = sbr.rel (%p134) target = $region28
        $region27: #{tpu_custom_call.1} parent=23 // pred_region
          %s137 = sand.u32 %s25, 1
          %s138 = scalar_lea.sflag [#allocation3], %s137
          %s139 = sand.u32 %s25, 1
          %s140 = smul.addr %s139, 8
          %s141 = scalar_lea.vmem [#allocation2], %s140
          %s143 = ssub.s32 128, 128
          %144 = vsyncadd %s138, %s143
          %s145 = smul.addr %s15, 128
          %s146 = scalar_lea.hbm %s0, %s145
          %s148 = sshll.u32 %s141, 4
          %s149 = int_to_ptr.vmem [resolvable:$true] %s148
          %151 = dma.hbm_to_vmem [thread:$0]  %s146, 128, %s149, %s138
        $region28: #{tpu_custom_call.1} parent=23 // pred_fallthru
          _
      $region24: #{tpu_custom_call.1} parent=5 // pred_fallthru
        _
      %p152 = scmp.le.s32.totalorder 1, %s15
      %p153 = scmp.lt.s32.totalorder %s15, 3
      %p154 = pnand %p152, %p153
      %p155 = pneg %p154
      // Predicated region
      $region29: #{tpu_custom_call.1} parent=5 // pred_check
        _
      $region30: #{tpu_custom_call.1} parent=5 // pred_check_branch
        %157 = sbr.rel (%p154) target = $region32
      $region31: #{tpu_custom_call.1} parent=5 // pred_region
        %s158 = ssub.s32 %s15, 1
        %s159 = sand.u32 %s28, 1
        %s160 = scalar_lea.sflag [#allocation3], %s159
        %s161 = sand.u32 %s28, 1
        %s162 = smul.addr %s161, 8
        %s163 = scalar_lea.vmem [#allocation2], %s162
        // Predicated region
        $region33: #{tpu_custom_call.1} parent=31 // pred_check
          %p164 = pneg %p41
        $region34: #{tpu_custom_call.1} parent=31 // pred_check_branch
          %166 = sbr.rel (%p164) target = $region36
        $region35: #{tpu_custom_call.1} parent=31 // pred_region
          %167 = dma.done %s160, 128
        $region36: #{tpu_custom_call.1} parent=31 // pred_fallthru
          _
        %s168 = sand.u32 %s28, 1
        %s169 = scalar_lea.sflag [#allocation3], %s168
        %s170 = sand.u32 %s28, 1
        %s171 = smul.addr %s170, 8
        %s172 = scalar_lea.vmem [#allocation2], %s171
        %p173 = pneg %p41
        %p174 = pneg %p38
        %p175 = pneg %p62
        %p176 = pneg %p59
        %p177 = pneg %p83
        %p178 = pneg %p80
        %p179 = pneg %p109
        %p180 = pneg %p106
        %s181 = sand.u32 %s96, 1
        %s182 = scalar_lea.sflag [#allocation4], %s181
        %s183 = sand.u32 %s96, 1
        %s184 = smul.addr %s183, 8
        %s185 = scalar_lea.vmem [#allocation5], %s184
        %v186 = vld [vmem:[%s163] sm:$0xff]
        %vm187 = vcmask 130048
        %v188 = vsel %vm187, %v186, 0.0
        %189 = vadd.xlane.f32.xlu0 %v188
        %v190 = vpop.xlane.xlu0 %189
        %v191 = vmul.f32 %v190, 0.0625
        %v192 = vld [vmem:[%s1] sm:$0xff]
        %v194 = vlaneseq
        %v195 = vand.u32 %v194, 127
        %v196 = vlaneseq
        %v197 = vshrl.u32 %v196, 7
        %v198 = vsub.s32 %v195, %v197
        %v199 = vrot.slane %v191, %v198
        %vm200 = vcmask 64512
        %v201 = vsel %vm200, %v199, 0
        %203 = vmatprep.subr.mxu0 0.0
        %204 = vmatpush1.msra.mxu0 %v192
        %205 = vmatprep.subr.mxu0 0.0
        %206 = vmatpush1.msra.mxu0 0.0
        %207 = vmatprep.subr.mxu0 0.0
        %208 = vmatpush1.msra.mxu0 0.0
        %209 = vmatprep.subr.mxu0 0.0
        %210 = vmatpush1.msra.mxu0 0.0
        %211 = vmatprep.subr.mxu0 0.0
        %212 = vmatpush1.msra.mxu0 0.0
        %213 = vmatprep.subr.mxu0 0.0
        %214 = vmatpush1.msra.mxu0 0.0
        %215 = vmatprep.subr.mxu0 0.0
        %216 = vmatpush1.msra.mxu0 0.0
        %217 = vmatprep.subr.mxu0 0.0
        %218 = vmatpush1.msra.mxu0 0.0
        %219 = vmatprep.subr.mxu0 0.0
        %220 = vmatpush1.msra.mxu0 0.0
        %221 = vmatprep.subr.mxu0 0.0
        %222 = vmatpush1.msra.mxu0 0.0
        %223 = vmatprep.subr.mxu0 0.0
        %224 = vmatpush1.msra.mxu0 0.0
        %225 = vmatprep.subr.mxu0 0.0
        %226 = vmatpush1.msra.mxu0 0.0
        %227 = vmatprep.subr.mxu0 0.0
        %228 = vmatpush1.msra.mxu0 0.0
        %229 = vmatprep.subr.mxu0 0.0
        %230 = vmatpush1.msra.mxu0 0.0
        %231 = vmatprep.subr.mxu0 0.0
        %232 = vmatpush1.msra.mxu0 0.0
        %233 = vmatprep.subr.mxu0 0.0
        %234 = vmatpush1.msra.mxu0 0.0
        %235 = vmatprep.subr.mxu0 0.0
        %236 = vmatpush1.msra.mxu0 0.0
        %237 = vmatprep.subr.mxu0 0.0
        %238 = vmatpush1.msra.mxu0 0.0
        %239 = vmatprep.subr.mxu0 0.0
        %240 = vmatpush1.msra.mxu0 0.0
        %241 = vmatprep.subr.mxu0 0.0
        %242 = vmatpush1.msra.mxu0 0.0
        %243 = vmatprep.subr.mxu0 0.0
        %244 = vmatpush1.msra.mxu0 0.0
        %245 = vmatprep.subr.mxu0 0.0
        %246 = vmatpush1.msra.mxu0 0.0
        %247 = vmatprep.subr.mxu0 0.0
        %248 = vmatpush1.msra.mxu0 0.0
        %249 = vmatprep.subr.mxu0 0.0
        %250 = vmatpush1.msra.mxu0 0.0
        %251 = vmatprep.subr.mxu0 0.0
        %252 = vmatpush1.msra.mxu0 0.0
        %253 = vmatprep.subr.mxu0 0.0
        %254 = vmatpush1.msra.mxu0 0.0
        %255 = vmatprep.subr.mxu0 0.0
        %256 = vmatpush1.msra.mxu0 0.0
        %257 = vmatprep.subr.mxu0 0.0
        %258 = vmatpush1.msra.mxu0 0.0
        %259 = vmatprep.subr.mxu0 0.0
        %260 = vmatpush1.msra.mxu0 0.0
        %261 = vmatprep.subr.mxu0 0.0
        %262 = vmatpush1.msra.mxu0 0.0
        %263 = vmatprep.subr.mxu0 0.0
        %264 = vmatpush1.msra.mxu0 0.0
        %265 = vmatprep.subr.mxu0 0.0
        %266 = vmatpush1.msra.mxu0 0.0
        %267 = vmatprep.mubr.f32.mxu0 0.0
        %268 = vmatmul.mubr.f32.gmra.mrb[0].mxu0 %v201
        %v269 = vpop.f32.mrb[0].mxu0
        %v270 = vadd.f32 0.0, %v269
        %v271 = vpop.f32.mrb[0].mxu0
        %272 = vdwg.mxu0
        %v273 = vmax.f32 %v270, 0.0
        %v274 = vld [vmem:[%s2] sm:$0xf]
        %vm275 = vcmask 31744
        %v277 = vsel %vm275, %v273, 0
        %vm279 = vcmask 1043456
        %v281 = vsel %vm279, %v274, 0
        %283 = vmatprep.subr.mxu0 0.0
        %284 = vmatpush1.msra.mxu0 %v281
        %285 = vmatprep.subr.mxu0 0.0
        %286 = vmatpush1.msra.mxu0 0.0
        %287 = vmatprep.subr.mxu0 0.0
        %288 = vmatpush1.msra.mxu0 0.0
        %289 = vmatprep.subr.mxu0 0.0
        %290 = vmatpush1.msra.mxu0 0.0
        %291 = vmatprep.subr.mxu0 0.0
        %292 = vmatpush1.msra.mxu0 0.0
        %293 = vmatprep.subr.mxu0 0.0
        %294 = vmatpush1.msra.mxu0 0.0
        %295 = vmatprep.subr.mxu0 0.0
        %296 = vmatpush1.msra.mxu0 0.0
        %297 = vmatprep.subr.mxu0 0.0
        %298 = vmatpush1.msra.mxu0 0.0
        %299 = vmatprep.subr.mxu0 0.0
        %300 = vmatpush1.msra.mxu0 0.0
        %301 = vmatprep.subr.mxu0 0.0
        %302 = vmatpush1.msra.mxu0 0.0
        %303 = vmatprep.subr.mxu0 0.0
        %304 = vmatpush1.msra.mxu0 0.0
        %305 = vmatprep.subr.mxu0 0.0
        %306 = vmatpush1.msra.mxu0 0.0
        %307 = vmatprep.subr.mxu0 0.0
        %308 = vmatpush1.msra.mxu0 0.0
        %309 = vmatprep.subr.mxu0 0.0
        %310 = vmatpush1.msra.mxu0 0.0
        %311 = vmatprep.subr.mxu0 0.0
        %312 = vmatpush1.msra.mxu0 0.0
        %313 = vmatprep.subr.mxu0 0.0
        %314 = vmatpush1.msra.mxu0 0.0
        %315 = vmatprep.subr.mxu0 0.0
        %316 = vmatpush1.msra.mxu0 0.0
        %317 = vmatprep.subr.mxu0 0.0
        %318 = vmatpush1.msra.mxu0 0.0
        %319 = vmatprep.subr.mxu0 0.0
        %320 = vmatpush1.msra.mxu0 0.0
        %321 = vmatprep.subr.mxu0 0.0
        %322 = vmatpush1.msra.mxu0 0.0
        %323 = vmatprep.subr.mxu0 0.0
        %324 = vmatpush1.msra.mxu0 0.0
        %325 = vmatprep.subr.mxu0 0.0
        %326 = vmatpush1.msra.mxu0 0.0
        %327 = vmatprep.subr.mxu0 0.0
        %328 = vmatpush1.msra.mxu0 0.0
        %329 = vmatprep.subr.mxu0 0.0
        %330 = vmatpush1.msra.mxu0 0.0
        %331 = vmatprep.subr.mxu0 0.0
        %332 = vmatpush1.msra.mxu0 0.0
        %333 = vmatprep.subr.mxu0 0.0
        %334 = vmatpush1.msra.mxu0 0.0
        %335 = vmatprep.subr.mxu0 0.0
        %336 = vmatpush1.msra.mxu0 0.0
        %337 = vmatprep.subr.mxu0 0.0
        %338 = vmatpush1.msra.mxu0 0.0
        %339 = vmatprep.subr.mxu0 0.0
        %340 = vmatpush1.msra.mxu0 0.0
        %341 = vmatprep.subr.mxu0 0.0
        %342 = vmatpush1.msra.mxu0 0.0
        %343 = vmatprep.subr.mxu0 0.0
        %344 = vmatpush1.msra.mxu0 0.0
        %345 = vmatprep.subr.mxu0 0.0
        %346 = vmatpush1.msra.mxu0 0.0
        %347 = vmatprep.mubr.f32.mxu0 0.0
        %348 = vmatmul.mubr.f32.gmra.mrb[0].mxu0 %v277
        %v349 = vpop.f32.mrb[0].mxu0
        %v350 = vadd.f32 0.0, %v349
        %v351 = vpop.f32.mrb[0].mxu0
        %352 = vdwg.mxu0
        %v353 = vxor.u32 %v350, 2147483648
        %v354 = vmul.f32 %v353, 1.442695
        %v355 = vpow.pop %v354
        %v356 = vadd.f32 %v355, 1.0
        %v357 = vrcp.pop %v356
        %v358 = vmul.f32 1.0, %v357
        %v359 = vlaneseq
        %v360 = vshrl.u32 %v359, 7
        %v361 = vsub.s32 0, %v360
        %v362 = vrot.slane %v358, %v361
        %364 = vbcast.lane.b32.xlu0 %v362, 256
        %v365 = vpop.permute.xlu0 %364
        %v366 = vmul.f32 %v186, %v365
        %367 = vst.msk [vmem:[%s185] sm:$0xff] %vm187, %v366
        %s368 = sand.u32 %s96, 1
        %s369 = scalar_lea.sflag [#allocation4], %s368
        %s370 = sand.u32 %s96, 1
        %s371 = smul.addr %s370, 8
        %s372 = scalar_lea.vmem [#allocation5], %s371
        // Predicated region
        $region37: #{tpu_custom_call.1} parent=31 // pred_check
          %p373 = pneg %p106
        $region38: #{tpu_custom_call.1} parent=31 // pred_check_branch
          %375 = sbr.rel (%p373) target = $region40
        $region39: #{tpu_custom_call.1} parent=31 // pred_region
          %s377 = ssub.s32 128, 128
          %378 = vsyncadd %s369, %s377
          %s379 = smul.addr %s20, 128
          %s380 = scalar_lea.hbm %s3, %s379
          %s382 = sshll.u32 %s372, 4
          %s383 = int_to_ptr.vmem [resolvable:$true] %s382
          %385 = dma.vmem_to_hbm [thread:$0]  %s383, 128, %s380, %s369
        $region40: #{tpu_custom_call.1} parent=31 // pred_fallthru
          _
      $region32: #{tpu_custom_call.1} parent=5 // pred_fallthru
        _
      %p386 = scmp.le.s32.totalorder 2, %s15
      // Predicated region
      $region41: #{tpu_custom_call.1} parent=5 // pred_check
        %p387 = pneg %p386
      $region42: #{tpu_custom_call.1} parent=5 // pred_check_branch
        %389 = sbr.rel (%p387) target = $region44
      $region43: #{tpu_custom_call.1} parent=5 // pred_region
        %s390 = ssub.s32 %s15, 2
        // Predicated region
        $region45: #{tpu_custom_call.1} parent=43 // pred_check
          %p391 = pneg %p112
        $region46: #{tpu_custom_call.1} parent=43 // pred_check_branch
          %393 = sbr.rel (%p391) target = $region48
        $region47: #{tpu_custom_call.1} parent=43 // pred_region
          %s394 = sand.u32 %s97, 1
          %s395 = scalar_lea.sflag [#allocation4], %s394
          %s396 = sand.u32 %s97, 1
          %s397 = smul.addr %s396, 8
          %s398 = scalar_lea.vmem [#allocation5], %s397
          %399 = dma.done %s395, 128
        $region48: #{tpu_custom_call.1} parent=43 // pred_fallthru
          _
      $region44: #{tpu_custom_call.1} parent=5 // pred_fallthru
        _
    $region6: #{tpu_custom_call.1} parent=1 // loop_footer
      %s19 = sadd.s32 1, %s15
    $region7: #{tpu_custom_call.1} parent=1 // loop_footer_branch
      %14 = sbr.rel target = $region3
    $region8: #{tpu_custom_call.1} parent=1 // loop_exit
      _
    %400 = vsyncpa [#allocation3], 1
    %s401 = scalar_lea.sflag [#allocation3], 1
    %402 = vsyncpa %s401, 1
    %403 = vsyncpa [#allocation4], 1
    %s404 = scalar_lea.sflag [#allocation4], 1
    %405 = vsyncpa %s404, 1

</llo_original>
